<compile_context>
chip_gen: v7x
topology: tpu7x:2x2x1
jax: 0.10.0
libtpu: 0.0.40
codegen_flags: <defaults>
</compile_context>

<pallas_src>
import jax
import jax.numpy as jnp
from jax.experimental import pallas as pl
from jax.experimental.pallas import tpu as pltpu


_MAX_TL_LANES = 4096            # widest time tile (multiple of 128 lanes)
_MAX_PIPELINE_BYTES = 24 << 20  # 2 in + 2 out double-buffered tiles, v7x-safe


def _copy_kernel(x_ref, o_ref):
    # Identical input/output blocks: pure copy, no in-kernel slicing.
    o_ref[...] = x_ref[...]


def _vmem_capacity_bytes() -> int:
    """Physical VMEM per TensorCore; conservative fallback if query fails."""
    try:
        info = pltpu.get_tpu_info()
        vmem = int(getattr(info, "vmem_capacity_bytes", 0))
        if vmem > 0:
            return vmem
    except Exception:
        pass
    return 64 << 20  # v7x physical VMEM per TC (smallest of all generations)


def _pick_tiles(rows: int, l_out: int, itemsize: int):
    """Pick (tr, tl): sublane-pack x 128-lane aligned tiles, lane width first."""
    pack = {1: 32, 2: 16}.get(itemsize, 8)   # int8 / bf16 / f32+ sublane packing
    vmem = _vmem_capacity_bytes()
    # 4 pipeline buffers (double-buffered input + output); never spend more
    # than half of physical VMEM nor exceed the v7x-safe 24 MiB footprint.
    per_buffer = min(_MAX_PIPELINE_BYTES, vmem // 2) // 4

    l128 = (l_out // 128) * 128              # caller guarantees l_out >= 128
    # Spend the byte budget on lane width first (lane-dense stores, fewer steps).
    tl_budget = max(128, (per_buffer // (pack * itemsize) // 128) * 128)
    tl = min(_MAX_TL_LANES, l128, tl_budget)
    # Then rows (full extent if it fits; otherwise a sublane-pack multiple).
    tr_budget = max(pack, (per_buffer // (tl * itemsize) // pack) * pack)
    tr = rows if rows <= tr_budget else tr_budget

    # Keep >= 2 grid blocks when shapes allow: v7x shards "parallel" grid axes
    # across its 2 TensorCores, and a single-block grid also removes any
    # DMA/compute overlap. Split rows first (keeps the lane-dense time width).
    if pl.cdiv(rows, tr) * pl.cdiv(l_out, tl) < 2:
        if rows > pack:
            half = -(-rows // 2)
            tr = min(tr, max(pack, ((half + pack - 1) // pack) * pack))
        elif l_out > 128:
            half = -(-l_out // 2)
            tl = min(tl, max(128, ((half + 127) // 128) * 128))
    return tr, tl


def _chomp_rows_pallas(x2: jnp.ndarray, l_out: int) -> jnp.ndarray:
    rows, l = x2.shape
    itemsize = jnp.dtype(x2.dtype).itemsize
    tr, tl = _pick_tiles(rows, l_out, itemsize)

    tile_bytes = tr * tl * itemsize
    footprint = 4 * tile_bytes  # double-buffered input + output
    vmem_limit = min(_vmem_capacity_bytes(),
                     max(32 << 20, footprint + (8 << 20)))

    cost = pl.CostEstimate(
        flops=0, transcendentals=0, bytes_accessed=2 * rows * l_out * itemsize
    )
    grid = (pl.cdiv(rows, tr), pl.cdiv(l_out, tl))
    return pl.pallas_call(
        _copy_kernel,
        out_shape=jax.ShapeDtypeStruct((rows, l_out), x2.dtype),
        grid_spec=pltpu.PrefetchScalarGridSpec(
            num_scalar_prefetch=0,
            grid=grid,
            # Same block + same index_map for input and output: only the kept
            # time prefix (< cdiv(l_out, tl) * tl <= L) is ever read from HBM.
            in_specs=[pl.BlockSpec((tr, tl), lambda i, k: (i, k))],
            out_specs=pl.BlockSpec((tr, tl), lambda i, k: (i, k)),
        ),
        compiler_params=pltpu.CompilerParams(
            dimension_semantics=("parallel", "parallel"),
            vmem_limit_bytes=vmem_limit,
        ),
        cost_estimate=cost,
    )(x2)


def chomp1d(x: jnp.ndarray, chomp_size: int) -> jnp.ndarray:
    """Drop the last `chomp_size` time steps of an (N, C, L) array."""
    assert chomp_size > 0, "chomp_size must be positive (matches x[:, :, :-c])"
    n, c, l = x.shape
    l_out = l - chomp_size
    assert l_out > 0, "chomp_size must be smaller than the sequence length"

    if l_out < 128:
        # Narrow-lane output would force masked vst.msk partial stores and the
        # kernel-launch overhead dominates: let XLA slice (and fuse upstream).
        return jax.lax.slice_in_dim(x, 0, l_out, axis=2)

    x2 = x.reshape(n * c, l)  # free for contiguous NCL layout
    return _chomp_rows_pallas(x2, l_out).reshape(n, c, l_out)


if __name__ == "__main__":
    key = jax.random.PRNGKey(0)

    cases = [
        ((2, 4, 16), 3),    # tiny shapes: XLA-slice fallback (l_out < 128)
        ((2, 8, 272), 16),  # l_out = 256: Pallas tiled path, exact tiles
        ((2, 8, 300), 9),   # l_out = 291: Pallas tiled path, masked time edge
    ]
    for shape, chomp in cases:
        key, sub = jax.random.split(key)
        x = jax.random.normal(sub, shape, dtype=jnp.float32)
        y = jax.block_until_ready(chomp1d(x, chomp))
        y_ref = x[:, :, :-chomp]  # PyTorch-equivalent reference
        assert y.shape == y_ref.shape, (y.shape, y_ref.shape)
        assert jnp.array_equal(y, y_ref), f"mismatch for shape={shape}, chomp={chomp}"

    print("KERNEL_OK")
</pallas_src>

<mosaic_0001>
module attributes {stable_mosaic.version = 11 : i64} {
  func.func @_copy_kernel(%arg0: i32, %arg1: i32, %arg2: memref<8x256xf32, #tpu.memory_space<vmem>>, %arg3: memref<8x256xf32, #tpu.memory_space<vmem>>) attributes {dimension_semantics = [#tpu.dimension_semantics<parallel>, #tpu.dimension_semantics<parallel>], iteration_bounds = array<i64: 2, 1>, scalar_prefetch = 0 : i64, scratch_operands = 0 : i64, tpu.core_type = #tpu.core_type<tc>, window_params = [{transform_indices = @transform_0, window_bounds = array<i64: 8, 256>}, {transform_indices = @transform_1, window_bounds = array<i64: 8, 256>}]} {
    %c0 = arith.constant 0 : index
    %c0_0 = arith.constant 0 : index
    %0 = vector.load %arg2[%c0, %c0_0] : memref<8x256xf32, #tpu.memory_space<vmem>>, vector<8x256xf32>
    %c0_1 = arith.constant 0 : index
    %c0_2 = arith.constant 0 : index
    %1 = vector.load %arg3[%c0_1, %c0_2] : memref<8x256xf32, #tpu.memory_space<vmem>>, vector<8x256xf32>
    tpu.vector_store %arg3[%c0_1, %c0_2], %0 {strides = array<i32>} : memref<8x256xf32, #tpu.memory_space<vmem>>, vector<8x256xf32>,
    return
  }
  func.func @transform_0(%arg0: i32, %arg1: i32) -> (i32, i32) {
    %c0_i32 = arith.constant 0 : i32
    return %arg0, %arg1 : i32, i32
  }
  func.func @transform_1(%arg0: i32, %arg1: i32) -> (i32, i32) {
    %c0_i32 = arith.constant 0 : i32
    return %arg0, %arg1 : i32, i32
  }
}

</mosaic_0001>

<llo_original>
// kernel: tpu_custom_call.1
$region0: #{tpu_custom_call.1}
  #allocation0 [shape = 'u32[]', space=smem, size = 0x4, offset = 0x4, fixed_abs, tag = 'smem constant byte address 0x4 - core index']
  #allocation1 [shape = 'u32[144,128]{1,0:T(1,128)}', space=vmem, size = 0x12000, scoped, tag = 'internal scratch']
  %s0 = inlined_call_operand.hbm [shape: f32[16,272], index: 0, kind: input, shape index: {}]
  %s1 = inlined_call_operand.hbm [shape: f32[16,256], index: 1, kind: output, shape index: {}]
  %s2 = sld [smem:[#allocation0]]
  $region41: #{tpu_custom_call.1} parent=0
    _
  %s4 = ssub.s32 1, %s2
  %s5 = scalar_select 0, %s4, %s2
  $region1: #{tpu_custom_call.1} parent=0
    #allocation2 [shape = 'u8[16384]{0}', space=vmem, size = 0x4000, scoped, tag = 'input window, operand 0']
    #allocation3 [shape = 's32[2]{0}', space=sflag, size = 0x8, scoped, tag = 'scoped memory for tpu_custom_call.1']
    #allocation4 [shape = 's32[2]{0}', space=sflag, size = 0x8, scoped, tag = 'scoped memory for tpu_custom_call.1']
    #allocation5 [shape = 'u8[16384]{0}', space=vmem, size = 0x4000, scoped, tag = 'output window, operand 0']
    %6 = vsyncpa [#allocation3], 0
    %s7 = scalar_lea.sflag [#allocation3], 1
    %8 = vsyncpa %s7, 0
    %9 = vsyncpa [#allocation4], 0
    %s10 = scalar_lea.sflag [#allocation4], 1
    %11 = vsyncpa %s10, 0
    loop: start=0, step=1, limit=4
    $region2: #{tpu_custom_call.1} parent=1 // loop_pre_header
      _
    $region3: #{tpu_custom_call.1} parent=1 // loop_header
      %s13 = sphi 0, %s17
      %p14 = scmp.ge.s32.totalorder %s13, 4
      %s20 = sphi 0, %s32
      %s21 = sphi 0, %s28
      %s22 = sphi 0, %s20
      %s23 = sphi 0, %s21
      %s24 = sphi 0, %s22
      %s25 = sphi 0, %s23
      %s37 = sphi 0, %s39
      %s40 = sphi 0, %s37
      %s41 = sphi 0, %s40
      %s57 = sphi 0, %s41
      %s65 = sphi 0, %s67
      %s68 = sphi 0, %s65
      %s69 = sphi 0, %s68
      %s85 = sphi 0, %s69
    $region4: #{tpu_custom_call.1} parent=1 // loop_header_branch
      %16 = sbr.rel (%p14) target = $region8
    $region5: #{tpu_custom_call.1} parent=1 // loop_body
      %s18 = ssub.s32 %s13, 1
      %s19 = ssub.s32 %s13, 2
      %s26 = sadd.s32 1, %s21
      %p27 = scmp.ge.s32.totalorder %s26, 1
      %s28 = scalar_select %p27, 0, %s26
      %s29 = sadd.s32 1, %s20
      %s30 = scalar_select %p27, %s29, %s20
      %p31 = scmp.ge.s32.totalorder %s30, 2
      %s32 = scalar_select %p31, 0, %s30
      %s33 = ssub.s32 %s20, %s32
      %s34 = ssub.s32 %s21, %s28
      %s35 = sor.u32 %s33, %s34
      %p36 = scmp.eq.s32.totalorder %s35, 0
      %s38 = sadd.s32 %s37, 1
      %s39 = scalar_select %p36, %s37, %s38
      %p42 = pneg %p36
      %p43 = scmp.eq.s32.totalorder %s13, 1
      %p44 = por %p42, %p43
      %p45 = scmp.ne.s32.totalorder %s37, %s40
      %p46 = scmp.eq.s32.totalorder %s13, 0
      %p47 = por %p45, %p46
      %p48 = scmp.ne.s32.totalorder %s37, %s40
      %p49 = scmp.eq.s32.totalorder %s18, 1
      %p50 = por %p48, %p49
      %p51 = scmp.ne.s32.totalorder %s40, %s41
      %p52 = scmp.eq.s32.totalorder %s18, 0
      %p53 = por %p51, %p52
      %p54 = scmp.ne.s32.totalorder %s40, %s41
      %p55 = scmp.eq.s32.totalorder %s19, 1
      %p56 = por %p54, %p55
      %p58 = scmp.ne.s32.totalorder %s41, %s57
      %p59 = scmp.eq.s32.totalorder %s19, 0
      %p60 = por %p58, %p59
      %s61 = ssub.s32 %s20, %s32
      %s62 = ssub.s32 %s21, %s28
      %s63 = sor.u32 %s61, %s62
      %p64 = scmp.eq.s32.totalorder %s63, 0
      %s66 = sadd.s32 %s65, 1
      %s67 = scalar_select %p64, %s65, %s66
      %p70 = pneg %p64
      %p71 = scmp.eq.s32.totalorder %s13, 1
      %p72 = por %p70, %p71
      %p73 = scmp.ne.s32.totalorder %s65, %s68
      %p74 = scmp.eq.s32.totalorder %s13, 0
      %p75 = por %p73, %p74
      %p76 = scmp.ne.s32.totalorder %s65, %s68
      %p77 = scmp.eq.s32.totalorder %s18, 1
      %p78 = por %p76, %p77
      %p79 = scmp.ne.s32.totalorder %s68, %s69
      %p80 = scmp.eq.s32.totalorder %s18, 0
      %p81 = por %p79, %p80
      %p82 = scmp.ne.s32.totalorder %s68, %s69
      %p83 = scmp.eq.s32.totalorder %s19, 1
      %p84 = por %p82, %p83
      %p86 = scmp.ne.s32.totalorder %s69, %s85
      %p87 = scmp.eq.s32.totalorder %s19, 0
      %p88 = por %p86, %p87
      %p89 = scmp.le.s32.totalorder 1, %s13
      %p90 = scmp.lt.s32.totalorder %s13, 3
      %p91 = pnand %p89, %p90
      %p92 = pneg %p91
      // Predicated region
      $region9: #{tpu_custom_call.1} parent=5 // pred_check
        _
      $region10: #{tpu_custom_call.1} parent=5 // pred_check_branch
        %94 = sbr.rel (%p91) target = $region12
      $region11: #{tpu_custom_call.1} parent=5 // pred_region
        %s95 = ssub.s32 %s13, 1
      $region12: #{tpu_custom_call.1} parent=5 // pred_fallthru
        _
      %p96 = scmp.lt.s32.totalorder %s13, 2
      // Predicated region
      $region13: #{tpu_custom_call.1} parent=5 // pred_check
        %p97 = pneg %p96
      $region14: #{tpu_custom_call.1} parent=5 // pred_check_branch
        %99 = sbr.rel (%p97) target = $region16
      $region15: #{tpu_custom_call.1} parent=5 // pred_region
        // Predicated region
        $region17: #{tpu_custom_call.1} parent=15 // pred_check
          %p100 = pneg %p47
        $region18: #{tpu_custom_call.1} parent=15 // pred_check_branch
          %102 = sbr.rel (%p100) target = $region20
        $region19: #{tpu_custom_call.1} parent=15 // pred_region
          %s103 = sand.u32 %s37, 1
          %s104 = scalar_lea.sflag [#allocation3], %s103
          %s105 = sand.u32 %s37, 1
          %s106 = smul.addr %s105, 16
          %s107 = scalar_lea.vmem [#allocation2], %s106
          %s108 = smul.u32 2, %s21
          %s109 = ssub.s32 3, %s108
          %p110 = scmp.lt.s32.totalorder %s109, 2
          %s111 = scalar_select %p110, %s109, 2
          %s112 = smul.u32 128, %s111
          %s114 = ssub.s32 256, %s112
          %115 = vsyncadd %s104, %s114
          %p116 = scmp.ne.s32.totalorder 0, %s112
          %s117 = smul.addr %s20, 3
          %s118 = sadd.s32 %s108, %s117
          %s119 = smul.addr %s118, 128
          %s120 = scalar_lea.hbm %s0, %s119
          %s121 = smul.u32 %s111, 8
          %s122 = sshll.u32 %s121, 4
          %s123 = sshll.u32 %s107, 4
          %s124 = int_to_ptr.vmem [resolvable:$true] %s123
          %126 = dma.hbm_to_vmem [thread:$0]  (%p116), %s120, %s122, %s124, %s104
        $region20: #{tpu_custom_call.1} parent=15 // pred_fallthru
          _
      $region16: #{tpu_custom_call.1} parent=5 // pred_fallthru
        _
      %p127 = scmp.le.s32.totalorder 1, %s13
      %p128 = scmp.lt.s32.totalorder %s13, 3
      %p129 = pnand %p127, %p128
      %p130 = pneg %p129
      // Predicated region
      $region21: #{tpu_custom_call.1} parent=5 // pred_check
        _
      $region22: #{tpu_custom_call.1} parent=5 // pred_check_branch
        %132 = sbr.rel (%p129) target = $region24
      $region23: #{tpu_custom_call.1} parent=5 // pred_region
        %s133 = ssub.s32 %s13, 1
        %s134 = sand.u32 %s40, 1
        %s135 = scalar_lea.sflag [#allocation3], %s134
        %s136 = sand.u32 %s40, 1
        %s137 = smul.addr %s136, 16
        %s138 = scalar_lea.vmem [#allocation2], %s137
        // Predicated region
        $region25: #{tpu_custom_call.1} parent=23 // pred_check
          %p139 = pneg %p53
        $region26: #{tpu_custom_call.1} parent=23 // pred_check_branch
          %141 = sbr.rel (%p139) target = $region28
        $region27: #{tpu_custom_call.1} parent=23 // pred_region
          %142 = dma.done %s135, 256
        $region28: #{tpu_custom_call.1} parent=23 // pred_fallthru
          _
        %s143 = sand.u32 %s40, 1
        %s144 = scalar_lea.sflag [#allocation3], %s143
        %s145 = sand.u32 %s40, 1
        %s146 = smul.addr %s145, 16
        %s147 = scalar_lea.vmem [#allocation2], %s146
        %p148 = pneg %p53
        %p149 = pneg %p50
        %p150 = pneg %p81
        %p151 = pneg %p78
        %s152 = sand.u32 %s68, 1
        %s153 = scalar_lea.sflag [#allocation4], %s152
        %s154 = sand.u32 %s68, 1
        %s155 = smul.addr %s154, 16
        %s156 = scalar_lea.vmem [#allocation5], %s155
        %s157 = smul.u32 2, %s23
        %s158 = ssub.s32 3, %s157
        %p159 = scmp.lt.s32.totalorder %s158, 2
        %s160 = scalar_select %p159, %s158, 2
        %s161 = smul.u32 128, %s160
        %s162 = smul.u32 2, %s23
        %v163 = vld [vmem:[%s138] sm:$0xff]
        %v164 = vld [vmem:[%s138 + $0x8] sm:$0xff]
        %165 = vst [vmem:[%s156] sm:$0xff] %v163
        %166 = vst [vmem:[%s156 + $0x8] sm:$0xff] %v164
        %s167 = sand.u32 %s68, 1
        %s168 = scalar_lea.sflag [#allocation4], %s167
        %s169 = sand.u32 %s68, 1
        %s170 = smul.addr %s169, 16
        %s171 = scalar_lea.vmem [#allocation5], %s170
        // Predicated region
        $region29: #{tpu_custom_call.1} parent=23 // pred_check
          %p172 = pneg %p78
        $region30: #{tpu_custom_call.1} parent=23 // pred_check_branch
          %174 = sbr.rel (%p172) target = $region32
        $region31: #{tpu_custom_call.1} parent=23 // pred_region
          %s175 = smul.u32 2, %s23
          %s177 = ssub.s32 256, 256
          %178 = vsyncadd %s168, %s177
          %s179 = smul.addr %s22, 2
          %s180 = sadd.s32 %s175, %s179
          %s181 = smul.addr %s180, 128
          %s182 = scalar_lea.hbm %s1, %s181
          %s184 = sshll.u32 %s171, 4
          %s185 = int_to_ptr.vmem [resolvable:$true] %s184
          %187 = dma.vmem_to_hbm [thread:$0]  %s185, 256, %s182, %s168
        $region32: #{tpu_custom_call.1} parent=23 // pred_fallthru
          _
      $region24: #{tpu_custom_call.1} parent=5 // pred_fallthru
        _
      %p188 = scmp.le.s32.totalorder 2, %s13
      // Predicated region
      $region33: #{tpu_custom_call.1} parent=5 // pred_check
        %p189 = pneg %p188
      $region34: #{tpu_custom_call.1} parent=5 // pred_check_branch
        %191 = sbr.rel (%p189) target = $region36
      $region35: #{tpu_custom_call.1} parent=5 // pred_region
        %s192 = ssub.s32 %s13, 2
        // Predicated region
        $region37: #{tpu_custom_call.1} parent=35 // pred_check
          %p193 = pneg %p84
        $region38: #{tpu_custom_call.1} parent=35 // pred_check_branch
          %195 = sbr.rel (%p193) target = $region40
        $region39: #{tpu_custom_call.1} parent=35 // pred_region
          %s196 = sand.u32 %s69, 1
          %s197 = scalar_lea.sflag [#allocation4], %s196
          %s198 = sand.u32 %s69, 1
          %s199 = smul.addr %s198, 16
          %s200 = scalar_lea.vmem [#allocation5], %s199
          %201 = dma.done %s197, 256
        $region40: #{tpu_custom_call.1} parent=35 // pred_fallthru
          _
      $region36: #{tpu_custom_call.1} parent=5 // pred_fallthru
        _
    $region6: #{tpu_custom_call.1} parent=1 // loop_footer
      %s17 = sadd.s32 1, %s13
    $region7: #{tpu_custom_call.1} parent=1 // loop_footer_branch
      %12 = sbr.rel target = $region3
    $region8: #{tpu_custom_call.1} parent=1 // loop_exit
      _
    %202 = vsyncpa [#allocation3], 1
    %s203 = scalar_lea.sflag [#allocation3], 1
    %204 = vsyncpa %s203, 1
    %205 = vsyncpa [#allocation4], 1
    %s206 = scalar_lea.sflag [#allocation4], 1
    %207 = vsyncpa %s206, 1

</llo_original>
